<compile_context>
chip_gen: v7x
topology: tpu7x:2x2x1
jax: 0.10.0
libtpu: 0.0.40
codegen_flags: <defaults>
</compile_context>

<pallas_src>
import jax
import jax.numpy as jnp
from jax.experimental import pallas as pl
from jax.experimental.pallas import tpu as pltpu

_LANE = 128
_SUBLANE_BF16 = 16            # bf16 packs 16 rows per vreg
_MAX_BATCH_TILE = 2048        # f32 h1/h2 temporaries stay inside v5e's 16 MiB scoped VMEM
_NEG_BIG = -1e30              # pad-bias value: exp() underflows to exactly 0.0


def _round_up(x, m):
    return ((x + m - 1) // m) * m


# ---------------------------------------------------------------------------
# Kernel
# ---------------------------------------------------------------------------
def actor_mlp_kernel(x_ref, w1_ref, b1_ref, w2_ref, b2_ref, w3_ref, b3_ref,
                     probs_ref):
    """One batch tile: 3x (matmul + bias [+ ReLU]) fused with softmax.

    Matmul inputs are bf16 (native MXU dtype), accumulation is f32.  Weights
    stay VMEM-resident across batch-tile grid steps (their index_map returns
    the same block), so only the x / probs tiles stream per step.  The final
    layer is computed at a lane-dense padded width; only the real n_actions
    columns are written back.
    """
    x = x_ref[...]                                            # bf16 (TB, S)

    # Linear 1 + ReLU
    h1 = jnp.dot(x, w1_ref[...], preferred_element_type=jnp.float32)
    h1 = jnp.maximum(h1 + b1_ref[...], 0.0)

    # Linear 2 + ReLU
    h2 = jnp.dot(h1.astype(jnp.bfloat16), w2_ref[...],
                 preferred_element_type=jnp.float32)
    h2 = jnp.maximum(h2 + b2_ref[...], 0.0)

    # Linear 3 -> logits (lane-dense, padded to a multiple of 128).
    logits = jnp.dot(h2.astype(jnp.bfloat16), w3_ref[...],
                     preferred_element_type=jnp.float32)
    logits = logits + b3_ref[...]

    # Numerically stable softmax over the padded action axis.  Padded columns
    # carry bias -1e30 (and zero weight columns) -> exp(...) == 0 exactly.
    m = jnp.max(logits, axis=-1, keepdims=True)
    e = jnp.exp(logits - m)
    denom = jnp.sum(e, axis=-1, keepdims=True)
    # approx reciprocal goes to the (otherwise idle) EUP slot; rows sum to 1
    # within ~1e-3 relative.
    inv = pl.reciprocal(denom, approx=True)

    # Store only the real action columns (output block width == n_actions).
    n_act = probs_ref.shape[-1]
    probs_ref[...] = (e[:, :n_act] * inv).astype(probs_ref.dtype)


# ---------------------------------------------------------------------------
# One-time parameter prep (hoisted out of the per-call path)
# ---------------------------------------------------------------------------
def prepare_actor_params(w1, b1, w2, b2, w3, b3):
    """Convert policy params to kernel layout once per policy update.

    Returns ((w1b, b1f, w2b, b2f, w3b_padded, b3_padded), n_actions).
    Weights are bf16 (halves the dominant weight DMA); the final layer is
    padded to a multiple of 128 lanes with zero weight columns and -1e30 bias
    columns so the padded lanes get exactly zero probability mass.
    """
    H2, A = w3.shape
    A_pad = _round_up(A, _LANE)

    w1b = jnp.asarray(w1, jnp.bfloat16)
    w2b = jnp.asarray(w2, jnp.bfloat16)
    w3b = jnp.zeros((H2, A_pad), jnp.bfloat16).at[:, :A].set(
        jnp.asarray(w3, jnp.bfloat16))

    b1f = jnp.asarray(b1, jnp.float32).reshape(1, -1)
    b2f = jnp.asarray(b2, jnp.float32).reshape(1, -1)
    b3p = jnp.full((1, A_pad), _NEG_BIG, jnp.float32).at[:, :A].set(
        jnp.asarray(b3, jnp.float32).reshape(1, -1))

    return (w1b, b1f, w2b, b2f, w3b, b3p), A


# ---------------------------------------------------------------------------
# Forward wrapper
# ---------------------------------------------------------------------------
def actor_forward(state, kernel_params, n_actions, *, block_batch=1024):
    """Action probabilities (the Categorical's probs), shape (B, n_actions).

    `kernel_params` must come from prepare_actor_params().
    """
    w1b, b1f, w2b, b2f, w3b, b3p = kernel_params
    B, S = state.shape
    H1 = w1b.shape[1]
    H2 = w2b.shape[1]
    A_pad = w3b.shape[1]
    A = int(n_actions)

    x = state.astype(jnp.bfloat16)        # only per-call prep that remains

    # ---- batch tile ----------------------------------------------------
    b16 = _round_up(B, _SUBLANE_BF16)
    tb = min(_round_up(block_batch, _SUBLANE_BF16), b16, _MAX_BATCH_TILE)
    if b16 >= 2 * _SUBLANE_BF16:
        # v7x megacore: keep >= 2 grid steps so the "parallel" batch axis can
        # shard across both TensorCores; no-op when nb is already >= 2.
        tb = min(tb, _round_up((b16 + 1) // 2, _SUBLANE_BF16))
    tb = max(tb, _SUBLANE_BF16)

    B_pad = _round_up(B, tb)
    if B_pad != B:
        x = jnp.pad(x, ((0, B_pad - B), (0, 0)))
    nb = B_pad // tb

    # ---- advisory cost estimate for XLA's scheduler ---------------------
    weight_bytes = 2 * (S * H1 + H1 * H2 + H2 * A_pad) + 4 * (H1 + H2 + A_pad)
    cost = pl.CostEstimate(
        flops=2 * B_pad * (S * H1 + H1 * H2 + H2 * A_pad),
        transcendentals=B_pad * A_pad,                    # softmax exp
        bytes_accessed=B_pad * S * 2 + weight_bytes + B_pad * A * 4,
    )

    out = pl.pallas_call(
        actor_mlp_kernel,
        out_shape=jax.ShapeDtypeStruct((B_pad, A), jnp.float32),
        grid_spec=pltpu.PrefetchScalarGridSpec(
            num_scalar_prefetch=0,
            grid=(nb,),
            in_specs=[
                pl.BlockSpec((tb, S), lambda i: (i, 0)),     # x tile streams
                pl.BlockSpec((S, H1), lambda i: (0, 0)),     # weights stay
                pl.BlockSpec((1, H1), lambda i: (0, 0)),     #   resident
                pl.BlockSpec((H1, H2), lambda i: (0, 0)),
                pl.BlockSpec((1, H2), lambda i: (0, 0)),
                pl.BlockSpec((H2, A_pad), lambda i: (0, 0)),
                pl.BlockSpec((1, A_pad), lambda i: (0, 0)),
            ],
            out_specs=pl.BlockSpec((tb, A), lambda i: (i, 0)),
        ),
        compiler_params=pltpu.CompilerParams(
            dimension_semantics=("parallel",)),
        cost_estimate=cost,
    )(x, w1b, b1f, w2b, b2f, w3b, b3p)

    return out if B_pad == B else out[:B]


# ---------------------------------------------------------------------------
# Init + references (test only)
# ---------------------------------------------------------------------------
def init_params(key, state_dims, fc1_dims, fc2_dims, n_actions):
    """Deterministic init mimicking PyTorch nn.Linear (uniform +-1/sqrt(fan_in))."""
    ks = jax.random.split(key, 6)

    def linear(kw, kb, fan_in, fan_out):
        bound = 1.0 / jnp.sqrt(jnp.float32(fan_in))
        w = jax.random.uniform(kw, (fan_in, fan_out), jnp.float32, -bound, bound)
        b = jax.random.uniform(kb, (1, fan_out), jnp.float32, -bound, bound)
        return w, b

    w1, b1 = linear(ks[0], ks[1], state_dims, fc1_dims)
    w2, b2 = linear(ks[2], ks[3], fc1_dims, fc2_dims)
    w3, b3 = linear(ks[4], ks[5], fc2_dims, n_actions)
    return w1, b1, w2, b2, w3, b3


def _ref_probs_bf16(state, w1, b1, w2, b2, w3, b3):
    """Pure-JAX reference with the same bf16-input / f32-accumulate pipeline."""
    xb = state.astype(jnp.bfloat16)
    h1 = jnp.maximum(jnp.dot(xb, w1.astype(jnp.bfloat16),
                             preferred_element_type=jnp.float32) + b1, 0.0)
    h2 = jnp.maximum(jnp.dot(h1.astype(jnp.bfloat16), w2.astype(jnp.bfloat16),
                             preferred_element_type=jnp.float32) + b2, 0.0)
    logits = jnp.dot(h2.astype(jnp.bfloat16), w3.astype(jnp.bfloat16),
                     preferred_element_type=jnp.float32) + b3
    return jax.nn.softmax(logits, axis=-1)


if __name__ == "__main__":
    state_dims = 32
    fc1_dims = 256
    fc2_dims = 256
    n_actions = 8

    key = jax.random.PRNGKey(0)
    k_state, k_state2, k_params = jax.random.split(key, 3)

    w1, b1, w2, b2, w3, b3 = init_params(
        k_params, state_dims, fc1_dims, fc2_dims, n_actions)

    # One-time layout prep (per policy update), reused across forward calls.
    kparams, A = prepare_actor_params(w1, b1, w2, b2, w3, b3)
    kparams = jax.block_until_ready(kparams)

    # --- small single-step call (act()-style inference path) ----------------
    batch = 8
    state = jax.random.normal(k_state, (batch, state_dims), dtype=jnp.float32)
    probs = jax.block_until_ready(actor_forward(state, kparams, A))

    ref_bf16 = _ref_probs_bf16(state, w1, b1, w2, b2, w3, b3)
    h1f = jnp.maximum(state @ w1 + b1, 0.0)
    h2f = jnp.maximum(h1f @ w2 + b2, 0.0)
    ref_f32 = jax.nn.softmax(h2f @ w3 + b3, axis=-1)

    assert probs.shape == (batch, n_actions)
    assert jnp.allclose(jnp.sum(probs, axis=-1), 1.0, atol=5e-3)
    assert jnp.allclose(probs, ref_bf16, atol=2e-3, rtol=2e-3)
    assert jnp.allclose(probs, ref_f32, atol=3e-2)

    # --- multi-tile call (exercises batch padding and a >= 2-step grid) -----
    batch2 = 40
    state2 = jax.random.normal(k_state2, (batch2, state_dims),
                               dtype=jnp.float32)
    probs2 = jax.block_until_ready(actor_forward(state2, kparams, A))
    ref2 = _ref_probs_bf16(state2, w1, b1, w2, b2, w3, b3)

    assert probs2.shape == (batch2, n_actions)
    assert jnp.allclose(jnp.sum(probs2, axis=-1), 1.0, atol=5e-3)
    assert jnp.allclose(probs2, ref2, atol=2e-3, rtol=2e-3)

    # TODO(synk): Categorical(dist) sampling/log_prob is a distribution object,
    # not a tensor op; only the probability tensor is produced here.
    print("KERNEL_OK")
</pallas_src>

<mosaic_0001>
module attributes {stable_mosaic.version = 11 : i64} {
  func.func @actor_mlp_kernel(%arg0: i32, %arg1: memref<16x32xbf16, #tpu.memory_space<vmem>>, %arg2: memref<32x256xbf16, #tpu.memory_space<vmem>>, %arg3: memref<1x256xf32, #tpu.memory_space<vmem>>, %arg4: memref<256x256xbf16, #tpu.memory_space<vmem>>, %arg5: memref<1x256xf32, #tpu.memory_space<vmem>>, %arg6: memref<256x128xbf16, #tpu.memory_space<vmem>>, %arg7: memref<1x128xf32, #tpu.memory_space<vmem>>, %arg8: memref<16x8xf32, #tpu.memory_space<vmem>>) attributes {dimension_semantics = [#tpu.dimension_semantics<parallel>], iteration_bounds = array<i64: 1>, scalar_prefetch = 0 : i64, scratch_operands = 0 : i64, tpu.core_type = #tpu.core_type<tc>, window_params = [{transform_indices = @transform_0, window_bounds = array<i64: 16, 32>}, {pipeline_mode = #tpu.pipeline_mode<synchronous>, transform_indices = @transform_1, window_bounds = array<i64: 32, 256>}, {pipeline_mode = #tpu.pipeline_mode<synchronous>, transform_indices = @transform_2, window_bounds = array<i64: 1, 256>}, {pipeline_mode = #tpu.pipeline_mode<synchronous>, transform_indices = @transform_3, window_bounds = array<i64: 256, 256>}, {pipeline_mode = #tpu.pipeline_mode<synchronous>, transform_indices = @transform_4, window_bounds = array<i64: 1, 256>}, {pipeline_mode = #tpu.pipeline_mode<synchronous>, transform_indices = @transform_5, window_bounds = array<i64: 256, 128>}, {pipeline_mode = #tpu.pipeline_mode<synchronous>, transform_indices = @transform_6, window_bounds = array<i64: 1, 128>}, {transform_indices = @transform_7, window_bounds = array<i64: 16, 8>}]} {
    %c0 = arith.constant 0 : index
    %c0_0 = arith.constant 0 : index
    %0 = vector.load %arg1[%c0, %c0_0] : memref<16x32xbf16, #tpu.memory_space<vmem>>, vector<16x32xbf16>
    %c0_1 = arith.constant 0 : index
    %c0_2 = arith.constant 0 : index
    %1 = vector.load %arg2[%c0_1, %c0_2] : memref<32x256xbf16, #tpu.memory_space<vmem>>, vector<32x256xbf16>
    %cst = arith.constant dense<0.000000e+00> : vector<16x256xf32>
    %2 = tpu.matmul %0, %1, %cst {dimension_numbers = #tpu.dot_dimension_numbers<[1], [0], [0], [1], [0, 0, 1, 1], [], []>} : vector<16x32xbf16>, vector<32x256xbf16>, vector<16x256xf32> -> vector<16x256xf32>
    %c0_3 = arith.constant 0 : index
    %c0_4 = arith.constant 0 : index
    %3 = vector.load %arg3[%c0_3, %c0_4] : memref<1x256xf32, #tpu.memory_space<vmem>>, vector<1x256xf32>
    %4 = vector.broadcast %3 : vector<1x256xf32> to vector<16x256xf32>
    %5 = arith.addf %2, %4 : vector<16x256xf32>
    %cst_5 = arith.constant 0.000000e+00 : f32
    %6 = vector.broadcast %cst_5 : f32 to vector<16x256xf32>
    %7 = arith.maximumf %5, %6 : vector<16x256xf32>
    %8 = arith.truncf %7 : vector<16x256xf32> to vector<16x256xbf16>
    %c0_6 = arith.constant 0 : index
    %c0_7 = arith.constant 0 : index
    %9 = vector.load %arg4[%c0_6, %c0_7] : memref<256x256xbf16, #tpu.memory_space<vmem>>, vector<256x256xbf16>
    %cst_8 = arith.constant dense<0.000000e+00> : vector<16x256xf32>
    %10 = tpu.matmul %8, %9, %cst_8 {dimension_numbers = #tpu.dot_dimension_numbers<[1], [0], [0], [1], [0, 0, 1, 1], [], []>} : vector<16x256xbf16>, vector<256x256xbf16>, vector<16x256xf32> -> vector<16x256xf32>
    %c0_9 = arith.constant 0 : index
    %c0_10 = arith.constant 0 : index
    %11 = vector.load %arg5[%c0_9, %c0_10] : memref<1x256xf32, #tpu.memory_space<vmem>>, vector<1x256xf32>
    %12 = vector.broadcast %11 : vector<1x256xf32> to vector<16x256xf32>
    %13 = arith.addf %10, %12 : vector<16x256xf32>
    %cst_11 = arith.constant 0.000000e+00 : f32
    %14 = vector.broadcast %cst_11 : f32 to vector<16x256xf32>
    %15 = arith.maximumf %13, %14 : vector<16x256xf32>
    %16 = arith.truncf %15 : vector<16x256xf32> to vector<16x256xbf16>
    %c0_12 = arith.constant 0 : index
    %c0_13 = arith.constant 0 : index
    %17 = vector.load %arg6[%c0_12, %c0_13] : memref<256x128xbf16, #tpu.memory_space<vmem>>, vector<256x128xbf16>
    %cst_14 = arith.constant dense<0.000000e+00> : vector<16x128xf32>
    %18 = tpu.matmul %16, %17, %cst_14 {dimension_numbers = #tpu.dot_dimension_numbers<[1], [0], [0], [1], [0, 0, 1, 1], [], []>} : vector<16x256xbf16>, vector<256x128xbf16>, vector<16x128xf32> -> vector<16x128xf32>
    %c0_15 = arith.constant 0 : index
    %c0_16 = arith.constant 0 : index
    %19 = vector.load %arg7[%c0_15, %c0_16] : memref<1x128xf32, #tpu.memory_space<vmem>>, vector<1x128xf32>
    %20 = vector.broadcast %19 : vector<1x128xf32> to vector<16x128xf32>
    %21 = arith.addf %18, %20 : vector<16x128xf32>
    %cst_17 = arith.constant dense<0xFF800000> : vector<16xf32>
    %22 = vector.multi_reduction <maximumf>, %21, %cst_17 [1] : vector<16x128xf32> to vector<16xf32>
    %23 = vector.shape_cast %22 : vector<16xf32> to vector<16x1xf32>
    %24 = vector.broadcast %23 : vector<16x1xf32> to vector<16x128xf32>
    %25 = arith.subf %21, %24 : vector<16x128xf32>
    %26 = math.exp %25 : vector<16x128xf32>
    %cst_18 = arith.constant dense<0.000000e+00> : vector<16xf32>
    %27 = vector.multi_reduction <add>, %26, %cst_18 [1] : vector<16x128xf32> to vector<16xf32>
    %28 = vector.shape_cast %27 : vector<16xf32> to vector<16x1xf32>
    %29 = tpu.reciprocal %28 {approx = true} : vector<16x1xf32> -> vector<16x1xf32>
    %30 = vector.extract_strided_slice %26 {offsets = [0, 0], sizes = [16, 8], strides = [1, 1]} : vector<16x128xf32> to vector<16x8xf32>
    %31 = vector.broadcast %29 : vector<16x1xf32> to vector<16x8xf32>
    %32 = arith.mulf %30, %31 : vector<16x8xf32>
    %c0_19 = arith.constant 0 : index
    %c0_20 = arith.constant 0 : index
    %33 = vector.load %arg8[%c0_19, %c0_20] : memref<16x8xf32, #tpu.memory_space<vmem>>, vector<16x8xf32>
    tpu.vector_store %arg8[%c0_19, %c0_20], %32 {strides = array<i32>} : memref<16x8xf32, #tpu.memory_space<vmem>>, vector<16x8xf32>,
    return
  }
  func.func @transform_0(%arg0: i32) -> (i32, i32) {
    %c0_i32 = arith.constant 0 : i32
    %c0_i32_0 = arith.constant 0 : i32
    return %arg0, %c0_i32 : i32, i32
  }
  func.func @transform_1(%arg0: i32) -> (i32, i32) {
    %c0_i32 = arith.constant 0 : i32
    %c0_i32_0 = arith.constant 0 : i32
    %c0_i32_1 = arith.constant 0 : i32
    return %c0_i32, %c0_i32_0 : i32, i32
  }
  func.func @transform_2(%arg0: i32) -> (i32, i32) {
    %c0_i32 = arith.constant 0 : i32
    %c0_i32_0 = arith.constant 0 : i32
    %c0_i32_1 = arith.constant 0 : i32
    return %c0_i32, %c0_i32_0 : i32, i32
  }
  func.func @transform_3(%arg0: i32) -> (i32, i32) {
    %c0_i32 = arith.constant 0 : i32
    %c0_i32_0 = arith.constant 0 : i32
    %c0_i32_1 = arith.constant 0 : i32
    return %c0_i32, %c0_i32_0 : i32, i32
  }
  func.func @transform_4(%arg0: i32) -> (i32, i32) {
    %c0_i32 = arith.constant 0 : i32
    %c0_i32_0 = arith.constant 0 : i32
    %c0_i32_1 = arith.constant 0 : i32
    return %c0_i32, %c0_i32_0 : i32, i32
  }
  func.func @transform_5(%arg0: i32) -> (i32, i32) {
    %c0_i32 = arith.constant 0 : i32
    %c0_i32_0 = arith.constant 0 : i32
    %c0_i32_1 = arith.constant 0 : i32
    return %c0_i32, %c0_i32_0 : i32, i32
  }
  func.func @transform_6(%arg0: i32) -> (i32, i32) {
    %c0_i32 = arith.constant 0 : i32
    %c0_i32_0 = arith.constant 0 : i32
    %c0_i32_1 = arith.constant 0 : i32
    return %c0_i32, %c0_i32_0 : i32, i32
  }
  func.func @transform_7(%arg0: i32) -> (i32, i32) {
    %c0_i32 = arith.constant 0 : i32
    %c0_i32_0 = arith.constant 0 : i32
    return %arg0, %c0_i32 : i32, i32
  }
}

</mosaic_0001>

<llo_original>
// kernel: tpu_custom_call.1
$region0: #{tpu_custom_call.1}
  #allocation0 [shape = 'u32[]', space=smem, size = 0x4, offset = 0x4, fixed_abs, tag = 'smem constant byte address 0x4 - core index']
  #allocation1 [shape = 'u32[144,128]{1,0:T(1,128)}', space=vmem, size = 0x12000, scoped, tag = 'internal scratch']
  %s0 = inlined_call_operand.hbm [shape: bf16[16,32], index: 0, kind: input, shape index: {}]
  %s1 = inlined_call_operand.hbm [shape: bf16[32,256], index: 1, kind: input, shape index: {}]
  %s2 = inlined_call_operand.vmem [shape: f32[1,256], index: 2, kind: input, shape index: {}]
  %s3 = inlined_call_operand.hbm [shape: bf16[256,256], index: 3, kind: input, shape index: {}]
  %s4 = inlined_call_operand.vmem [shape: f32[1,256], index: 4, kind: input, shape index: {}]
  %s5 = inlined_call_operand.hbm [shape: bf16[256,128], index: 5, kind: input, shape index: {}]
  %s6 = inlined_call_operand.vmem [shape: f32[1,128], index: 6, kind: input, shape index: {}]
  %s7 = inlined_call_operand.vmem [shape: f32[16,8], index: 7, kind: output, shape index: {}]
  %s8 = sld [smem:[#allocation0]]
  $region54: #{tpu_custom_call.1} parent=0
    _
  %s10 = ssub.s32 1, %s8
  %s11 = scalar_select 0, %s10, %s8
  $region1: #{tpu_custom_call.1} parent=0
    #allocation2 [shape = 'u8[4096]{0}', space=vmem, size = 0x1000, scoped, tag = 'input window, operand 0, single buffered']
    #allocation3 [shape = 's32[1]{0}', space=sflag, size = 0x4, scoped, tag = 'scoped memory for tpu_custom_call.1']
    #allocation4 [shape = 'u8[16384]{0}', space=vmem, size = 0x4000, scoped, tag = 'input window, operand 1, single buffered']
    #allocation5 [shape = 's32[1]{0}', space=sflag, size = 0x4, scoped, tag = 'scoped memory for tpu_custom_call.1']
    #allocation6 [shape = 'u8[131072]{0}', space=vmem, size = 0x20000, scoped, tag = 'input window, operand 3, single buffered']
    #allocation7 [shape = 'u8[65536]{0}', space=vmem, size = 0x10000, scoped, tag = 'input window, operand 5, single buffered']
    #allocation8 [shape = 's32[1]{0}', space=sflag, size = 0x4, scoped, tag = 'scoped memory for tpu_custom_call.1']
    %12 = vsyncpa [#allocation3], 0
    %13 = vsyncpa [#allocation5], 0
    %14 = vsyncpa [#allocation8], 0
    // Predicated region
    $region2: #{tpu_custom_call.1} parent=1 // pred_check
      _
    $region3: #{tpu_custom_call.1} parent=1 // pred_check_branch
      %16 = sbr.rel (0) target = $region5
    $region4: #{tpu_custom_call.1} parent=1 // pred_region
      %s18 = ssub.s32 128, 128
      %19 = vsyncadd [#allocation3], %s18
      %s20 = sshll.u32 [#allocation2], 4
      %s21 = int_to_ptr.vmem [resolvable:$true] %s20
      %26 = dma.hbm_to_vmem [thread:$0]  %s0, 128, %s21, [#allocation3], 64, 64, 4
    $region5: #{tpu_custom_call.1} parent=1 // pred_fallthru
      _
    // Predicated region
    $region6: #{tpu_custom_call.1} parent=1 // pred_check
      _
    $region7: #{tpu_custom_call.1} parent=1 // pred_check_branch
      %28 = sbr.rel (0) target = $region9
    $region8: #{tpu_custom_call.1} parent=1 // pred_region
      %s30 = ssub.s32 512, 512
      %31 = vsyncadd [#allocation5], %s30
      %s32 = sshll.u32 [#allocation4], 4
      %s33 = int_to_ptr.vmem [resolvable:$true] %s32
      %38 = dma.hbm_to_vmem [thread:$0]  %s1, 512, %s33, [#allocation5], 128, 128, 8
    $region9: #{tpu_custom_call.1} parent=1 // pred_fallthru
      _
    // Predicated region
    $region10: #{tpu_custom_call.1} parent=1 // pred_check
      _
    $region11: #{tpu_custom_call.1} parent=1 // pred_check_branch
      %40 = sbr.rel (0) target = $region13
    $region12: #{tpu_custom_call.1} parent=1 // pred_region
      _
    $region13: #{tpu_custom_call.1} parent=1 // pred_fallthru
      _
    // Predicated region
    $region14: #{tpu_custom_call.1} parent=1 // pred_check
      _
    $region15: #{tpu_custom_call.1} parent=1 // pred_check_branch
      %42 = sbr.rel (0) target = $region17
    $region16: #{tpu_custom_call.1} parent=1 // pred_region
      %s44 = ssub.s32 4096, 4096
      %45 = vsyncadd [#allocation5], %s44
      %s46 = sshll.u32 [#allocation6], 4
      %s47 = int_to_ptr.vmem [resolvable:$true] %s46
      %52 = dma.hbm_to_vmem [thread:$0]  %s3, 4096, %s47, [#allocation5], 128, 128, 8
    $region17: #{tpu_custom_call.1} parent=1 // pred_fallthru
      _
    // Predicated region
    $region18: #{tpu_custom_call.1} parent=1 // pred_check
      _
    $region19: #{tpu_custom_call.1} parent=1 // pred_check_branch
      %54 = sbr.rel (0) target = $region21
    $region20: #{tpu_custom_call.1} parent=1 // pred_region
      _
    $region21: #{tpu_custom_call.1} parent=1 // pred_fallthru
      _
    // Predicated region
    $region22: #{tpu_custom_call.1} parent=1 // pred_check
      _
    $region23: #{tpu_custom_call.1} parent=1 // pred_check_branch
      %56 = sbr.rel (0) target = $region25
    $region24: #{tpu_custom_call.1} parent=1 // pred_region
      %s58 = ssub.s32 2048, 2048
      %59 = vsyncadd [#allocation8], %s58
      %s60 = sshll.u32 [#allocation7], 4
      %s61 = int_to_ptr.vmem [resolvable:$true] %s60
      %66 = dma.hbm_to_vmem [thread:$0]  %s5, 2048, %s61, [#allocation8], 64, 64, 4
    $region25: #{tpu_custom_call.1} parent=1 // pred_fallthru
      _
    // Predicated region
    $region26: #{tpu_custom_call.1} parent=1 // pred_check
      _
    $region27: #{tpu_custom_call.1} parent=1 // pred_check_branch
      %68 = sbr.rel (0) target = $region29
    $region28: #{tpu_custom_call.1} parent=1 // pred_region
      _
    $region29: #{tpu_custom_call.1} parent=1 // pred_fallthru
      _
    // Predicated region
    $region30: #{tpu_custom_call.1} parent=1 // pred_check
      _
    $region31: #{tpu_custom_call.1} parent=1 // pred_check_branch
      %70 = sbr.rel (0) target = $region33
    $region32: #{tpu_custom_call.1} parent=1 // pred_region
      %71 = dma.done [#allocation3], 128
    $region33: #{tpu_custom_call.1} parent=1 // pred_fallthru
      _
    // Predicated region
    $region34: #{tpu_custom_call.1} parent=1 // pred_check
      _
    $region35: #{tpu_custom_call.1} parent=1 // pred_check_branch
      %73 = sbr.rel (0) target = $region37
    $region36: #{tpu_custom_call.1} parent=1 // pred_region
      %74 = dma.done [#allocation5], 512
    $region37: #{tpu_custom_call.1} parent=1 // pred_fallthru
      _
    // Predicated region
    $region38: #{tpu_custom_call.1} parent=1 // pred_check
      _
    $region39: #{tpu_custom_call.1} parent=1 // pred_check_branch
      %76 = sbr.rel (0) target = $region41
    $region40: #{tpu_custom_call.1} parent=1 // pred_region
      %77 = dma.done [#allocation5], 4096
    $region41: #{tpu_custom_call.1} parent=1 // pred_fallthru
      _
    // Predicated region
    $region42: #{tpu_custom_call.1} parent=1 // pred_check
      _
    $region43: #{tpu_custom_call.1} parent=1 // pred_check_branch
      %79 = sbr.rel (0) target = $region45
    $region44: #{tpu_custom_call.1} parent=1 // pred_region
      %80 = dma.done [#allocation8], 2048
    $region45: #{tpu_custom_call.1} parent=1 // pred_fallthru
      _
    %v82 = vld [vmem:[#allocation2] sm:$0xf]
    %v83 = vld [vmem:[#allocation2 + $0x4] sm:$0xf]
    %v84 = vld [vmem:[#allocation4] sm:$0xff]
    %v85 = vld [vmem:[#allocation4 + $0x8] sm:$0xff]
    %v86 = vld [vmem:[#allocation4 + $0x10] sm:$0xff]
    %v87 = vld [vmem:[#allocation4 + $0x18] sm:$0xff]
    %v88 = vld [vmem:[%s2] sm:$0x3]
    %v90 = vlaneseq
    %v91 = vshrl.u32 %v90, 7
    %v92 = vsub.s32 0, %v91
    %v93 = vrot.slane %v88, %v92
    %v94 = vlaneseq
    %v95 = vshrl.u32 %v94, 7
    %v96 = vsub.s32 1, %v95
    %v97 = vrot.slane %v88, %v96
    %v102 = vunpack.c.l.b16 %v82
    %v103 = vunpack.c.l.b16 %v83
    %v104 = vpack.c.b16 %v103, %v102
    %v109 = vunpack.c.l.b16 %v84
    %v110 = vunpack.c.h.b16 %v84
    %v111 = vunpack.c.l.b16 %v85
    %v112 = vunpack.c.h.b16 %v85
    %v113 = vunpack.c.l.b16 %v86
    %v114 = vunpack.c.h.b16 %v86
    %v115 = vunpack.c.l.b16 %v87
    %v116 = vunpack.c.h.b16 %v87
    %v117 = vpack.c.b16 %v111, %v109
    %v118 = vpack.c.b16 %v112, %v110
    %v119 = vpack.c.b16 %v115, %v113
    %v120 = vpack.c.b16 %v116, %v114
    %vm125 = vcmask 261120
    %v127 = vsel %vm125, %v104, 0
    %129 = vmatprep.subr.bf16.mxu0 %v118
    %130 = vmatpush1.bf16.msra.mxu0 %v117
    %131 = vmatprep.subr.bf16.mxu0 %v120
    %132 = vmatpush1.bf16.msra.mxu0 %v119
    %133 = vmatprep.subr.bf16.mxu0 0
    %134 = vmatpush1.bf16.msra.mxu0 0
    %135 = vmatprep.subr.bf16.mxu0 0
    %136 = vmatpush1.bf16.msra.mxu0 0
    %137 = vmatprep.subr.bf16.mxu0 0
    %138 = vmatpush1.bf16.msra.mxu0 0
    %139 = vmatprep.subr.bf16.mxu0 0
    %140 = vmatpush1.bf16.msra.mxu0 0
    %141 = vmatprep.subr.bf16.mxu0 0
    %142 = vmatpush1.bf16.msra.mxu0 0
    %143 = vmatprep.subr.bf16.mxu0 0
    %144 = vmatpush1.bf16.msra.mxu0 0
    %145 = vmatprep.subr.bf16.mxu0 0
    %146 = vmatpush1.bf16.msra.mxu0 0
    %147 = vmatprep.subr.bf16.mxu0 0
    %148 = vmatpush1.bf16.msra.mxu0 0
    %149 = vmatprep.subr.bf16.mxu0 0
    %150 = vmatpush1.bf16.msra.mxu0 0
    %151 = vmatprep.subr.bf16.mxu0 0
    %152 = vmatpush1.bf16.msra.mxu0 0
    %153 = vmatprep.subr.bf16.mxu0 0
    %154 = vmatpush1.bf16.msra.mxu0 0
    %155 = vmatprep.subr.bf16.mxu0 0
    %156 = vmatpush1.bf16.msra.mxu0 0
    %157 = vmatprep.subr.bf16.mxu0 0
    %158 = vmatpush1.bf16.msra.mxu0 0
    %159 = vmatprep.subr.bf16.mxu0 0
    %160 = vmatpush1.bf16.msra.mxu0 0
    %161 = vmatprep.mubr.bf16.mxu0 0
    %162 = vmatmul.mubr.bf16.gmra.mrb[0].mxu0 %v127
    %v163 = vpop.f32.mrb[0].mxu0
    %v164 = vadd.f32 %v93, %v163
    %v165 = vpop.f32.mrb[0].mxu0
    %v166 = vadd.f32 %v97, %v165
    %v167 = vpop.f32.mrb[0].mxu0
    %v168 = vadd.f32 %v93, %v167
    %v169 = vpop.f32.mrb[0].mxu0
    %v170 = vadd.f32 %v97, %v169
    %171 = vdwg.mxu0
    %v172 = vmax.f32 %v164, 0.0
    %v173 = vmax.f32 %v166, 0.0
    %v174 = vmax.f32 %v168, 0.0
    %v175 = vmax.f32 %v170, 0.0
    %v176 = vpack.c.bf16 %v174, %v172
    %v177 = vpack.c.bf16 %v175, %v173
    %v178 = vld [vmem:[#allocation6] sm:$0xff]
    %v179 = vld [vmem:[#allocation6 + $0x8] sm:$0xff]
    %v180 = vld [vmem:[#allocation6 + $0x10] sm:$0xff]
    %v181 = vld [vmem:[#allocation6 + $0x18] sm:$0xff]
    %v182 = vld [vmem:[#allocation6 + $0x20] sm:$0xff]
    %v183 = vld [vmem:[#allocation6 + $0x28] sm:$0xff]
    %v184 = vld [vmem:[#allocation6 + $0x30] sm:$0xff]
    %v185 = vld [vmem:[#allocation6 + $0x38] sm:$0xff]
    %v186 = vld [vmem:[#allocation6 + $0x40] sm:$0xff]
    %v187 = vld [vmem:[#allocation6 + $0x48] sm:$0xff]
    %v188 = vld [vmem:[#allocation6 + $0x50] sm:$0xff]
    %v189 = vld [vmem:[#allocation6 + $0x58] sm:$0xff]
    %v190 = vld [vmem:[#allocation6 + $0x60] sm:$0xff]
    %v191 = vld [vmem:[#allocation6 + $0x68] sm:$0xff]
    %v192 = vld [vmem:[#allocation6 + $0x70] sm:$0xff]
    %v193 = vld [vmem:[#allocation6 + $0x78] sm:$0xff]
    %v194 = vld [vmem:[#allocation6 + $0x80] sm:$0xff]
    %v195 = vld [vmem:[#allocation6 + $0x88] sm:$0xff]
    %v196 = vld [vmem:[#allocation6 + $0x90] sm:$0xff]
    %v197 = vld [vmem:[#allocation6 + $0x98] sm:$0xff]
    %v198 = vld [vmem:[#allocation6 + $0xa0] sm:$0xff]
    %v199 = vld [vmem:[#allocation6 + $0xa8] sm:$0xff]
    %v200 = vld [vmem:[#allocation6 + $0xb0] sm:$0xff]
    %v201 = vld [vmem:[#allocation6 + $0xb8] sm:$0xff]
    %v202 = vld [vmem:[#allocation6 + $0xc0] sm:$0xff]
    %v203 = vld [vmem:[#allocation6 + $0xc8] sm:$0xff]
    %v204 = vld [vmem:[#allocation6 + $0xd0] sm:$0xff]
    %v205 = vld [vmem:[#allocation6 + $0xd8] sm:$0xff]
    %v206 = vld [vmem:[#allocation6 + $0xe0] sm:$0xff]
    %v207 = vld [vmem:[#allocation6 + $0xe8] sm:$0xff]
    %v208 = vld [vmem:[#allocation6 + $0xf0] sm:$0xff]
    %v209 = vld [vmem:[#allocation6 + $0xf8] sm:$0xff]
    %v210 = vld [vmem:[%s4] sm:$0x3]
    %v212 = vlaneseq
    %v213 = vshrl.u32 %v212, 7
    %v214 = vsub.s32 0, %v213
    %v215 = vrot.slane %v210, %v214
    %v216 = vlaneseq
    %v217 = vshrl.u32 %v216, 7
    %v218 = vsub.s32 1, %v217
    %v219 = vrot.slane %v210, %v218
    %v254 = vunpack.c.l.b16 %v178
    %v255 = vunpack.c.h.b16 %v178
    %v256 = vunpack.c.l.b16 %v179
    %v257 = vunpack.c.h.b16 %v179
    %v258 = vunpack.c.l.b16 %v180
    %v259 = vunpack.c.h.b16 %v180
    %v260 = vunpack.c.l.b16 %v181
    %v261 = vunpack.c.h.b16 %v181
    %v262 = vunpack.c.l.b16 %v182
    %v263 = vunpack.c.h.b16 %v182
    %v264 = vunpack.c.l.b16 %v183
    %v265 = vunpack.c.h.b16 %v183
    %v266 = vunpack.c.l.b16 %v184
    %v267 = vunpack.c.h.b16 %v184
    %v268 = vunpack.c.l.b16 %v185
    %v269 = vunpack.c.h.b16 %v185
    %v270 = vunpack.c.l.b16 %v186
    %v271 = vunpack.c.h.b16 %v186
    %v272 = vunpack.c.l.b16 %v187
    %v273 = vunpack.c.h.b16 %v187
    %v274 = vunpack.c.l.b16 %v188
    %v275 = vunpack.c.h.b16 %v188
    %v276 = vunpack.c.l.b16 %v189
    %v277 = vunpack.c.h.b16 %v189
    %v278 = vunpack.c.l.b16 %v190
    %v279 = vunpack.c.h.b16 %v190
    %v280 = vunpack.c.l.b16 %v191
    %v281 = vunpack.c.h.b16 %v191
    %v282 = vunpack.c.l.b16 %v192
    %v283 = vunpack.c.h.b16 %v192
    %v284 = vunpack.c.l.b16 %v193
    %v285 = vunpack.c.h.b16 %v193
    %v286 = vunpack.c.l.b16 %v194
    %v287 = vunpack.c.h.b16 %v194
    %v288 = vunpack.c.l.b16 %v195
    %v289 = vunpack.c.h.b16 %v195
    %v290 = vunpack.c.l.b16 %v196
    %v291 = vunpack.c.h.b16 %v196
    %v292 = vunpack.c.l.b16 %v197
    %v293 = vunpack.c.h.b16 %v197
    %v294 = vunpack.c.l.b16 %v198
    %v295 = vunpack.c.h.b16 %v198
    %v296 = vunpack.c.l.b16 %v199
    %v297 = vunpack.c.h.b16 %v199
    %v298 = vunpack.c.l.b16 %v200
    %v299 = vunpack.c.h.b16 %v200
    %v300 = vunpack.c.l.b16 %v201
    %v301 = vunpack.c.h.b16 %v201
    %v302 = vunpack.c.l.b16 %v202
    %v303 = vunpack.c.h.b16 %v202
    %v304 = vunpack.c.l.b16 %v203
    %v305 = vunpack.c.h.b16 %v203
    %v306 = vunpack.c.l.b16 %v204
    %v307 = vunpack.c.h.b16 %v204
    %v308 = vunpack.c.l.b16 %v205
    %v309 = vunpack.c.h.b16 %v205
    %v310 = vunpack.c.l.b16 %v206
    %v311 = vunpack.c.h.b16 %v206
    %v312 = vunpack.c.l.b16 %v207
    %v313 = vunpack.c.h.b16 %v207
    %v314 = vunpack.c.l.b16 %v208
    %v315 = vunpack.c.h.b16 %v208
    %v316 = vunpack.c.l.b16 %v209
    %v317 = vunpack.c.h.b16 %v209
    %v318 = vpack.c.b16 %v256, %v254
    %v319 = vpack.c.b16 %v257, %v255
    %v320 = vpack.c.b16 %v260, %v258
    %v321 = vpack.c.b16 %v261, %v259
    %v322 = vpack.c.b16 %v264, %v262
    %v323 = vpack.c.b16 %v265, %v263
    %v324 = vpack.c.b16 %v268, %v266
    %v325 = vpack.c.b16 %v269, %v267
    %v326 = vpack.c.b16 %v272, %v270
    %v327 = vpack.c.b16 %v273, %v271
    %v328 = vpack.c.b16 %v276, %v274
    %v329 = vpack.c.b16 %v277, %v275
    %v330 = vpack.c.b16 %v280, %v278
    %v331 = vpack.c.b16 %v281, %v279
    %v332 = vpack.c.b16 %v284, %v282
    %v333 = vpack.c.b16 %v285, %v283
    %v334 = vpack.c.b16 %v288, %v286
    %v335 = vpack.c.b16 %v289, %v287
    %v336 = vpack.c.b16 %v292, %v290
    %v337 = vpack.c.b16 %v293, %v291
    %v338 = vpack.c.b16 %v296, %v294
    %v339 = vpack.c.b16 %v297, %v295
    %v340 = vpack.c.b16 %v300, %v298
    %v341 = vpack.c.b16 %v301, %v299
    %v342 = vpack.c.b16 %v304, %v302
    %v343 = vpack.c.b16 %v305, %v303
    %v344 = vpack.c.b16 %v308, %v306
    %v345 = vpack.c.b16 %v309, %v307
    %v346 = vpack.c.b16 %v312, %v310
    %v347 = vpack.c.b16 %v313, %v311
    %v348 = vpack.c.b16 %v316, %v314
    %v349 = vpack.c.b16 %v317, %v315
    %382 = vmatprep.subr.bf16.mxu0 %v319
    %383 = vmatpush1.bf16.msra.mxu0 %v318
    %384 = vmatprep.subr.bf16.mxu0 %v321
    %385 = vmatpush1.bf16.msra.mxu0 %v320
    %386 = vmatprep.subr.bf16.mxu0 %v323
    %387 = vmatpush1.bf16.msra.mxu0 %v322
    %388 = vmatprep.subr.bf16.mxu0 %v325
    %389 = vmatpush1.bf16.msra.mxu0 %v324
    %390 = vmatprep.subr.bf16.mxu0 %v327
    %391 = vmatpush1.bf16.msra.mxu0 %v326
    %392 = vmatprep.subr.bf16.mxu0 %v329
    %393 = vmatpush1.bf16.msra.mxu0 %v328
    %394 = vmatprep.subr.bf16.mxu0 %v331
    %395 = vmatpush1.bf16.msra.mxu0 %v330
    %396 = vmatprep.subr.bf16.mxu0 %v333
    %397 = vmatpush1.bf16.msra.mxu0 %v332
    %398 = vmatprep.subr.bf16.mxu0 %v335
    %399 = vmatpush1.bf16.msra.mxu0 %v334
    %400 = vmatprep.subr.bf16.mxu0 %v337
    %401 = vmatpush1.bf16.msra.mxu0 %v336
    %402 = vmatprep.subr.bf16.mxu0 %v339
    %403 = vmatpush1.bf16.msra.mxu0 %v338
    %404 = vmatprep.subr.bf16.mxu0 %v341
    %405 = vmatpush1.bf16.msra.mxu0 %v340
    %406 = vmatprep.subr.bf16.mxu0 %v343
    %407 = vmatpush1.bf16.msra.mxu0 %v342
    %408 = vmatprep.subr.bf16.mxu0 %v345
    %409 = vmatpush1.bf16.msra.mxu0 %v344
    %410 = vmatprep.subr.bf16.mxu0 %v347
    %411 = vmatpush1.bf16.msra.mxu0 %v346
    %412 = vmatprep.subr.bf16.mxu0 %v349
    %413 = vmatpush1.bf16.msra.mxu0 %v348
    %414 = vmatprep.mubr.bf16.mxu0 %v177
    %415 = vmatmul.mubr.bf16.gmra.mrb[0].mxu0 %v176
    %v416 = vpop.f32.mrb[0].mxu0
    %v417 = vadd.f32 %v215, %v416
    %v418 = vpop.f32.mrb[0].mxu0
    %v419 = vadd.f32 %v219, %v418
    %v420 = vpop.f32.mrb[0].mxu0
    %v421 = vadd.f32 %v215, %v420
    %v422 = vpop.f32.mrb[0].mxu0
    %v423 = vadd.f32 %v219, %v422
    %424 = vdwg.mxu0
    %v425 = vmax.f32 %v417, 0.0
    %v426 = vmax.f32 %v419, 0.0
    %v427 = vmax.f32 %v421, 0.0
    %v428 = vmax.f32 %v423, 0.0
    %v429 = vpack.c.bf16 %v427, %v425
    %v430 = vpack.c.bf16 %v428, %v426
    %v431 = vld [vmem:[#allocation7] sm:$0xf]
    %v432 = vld [vmem:[#allocation7 + $0x4] sm:$0xf]
    %v433 = vld [vmem:[#allocation7 + $0x8] sm:$0xf]
    %v434 = vld [vmem:[#allocation7 + $0xc] sm:$0xf]
    %v435 = vld [vmem:[#allocation7 + $0x10] sm:$0xf]
    %v436 = vld [vmem:[#allocation7 + $0x14] sm:$0xf]
    %v437 = vld [vmem:[#allocation7 + $0x18] sm:$0xf]
    %v438 = vld [vmem:[#allocation7 + $0x1c] sm:$0xf]
    %v439 = vld [vmem:[#allocation7 + $0x20] sm:$0xf]
    %v440 = vld [vmem:[#allocation7 + $0x24] sm:$0xf]
    %v441 = vld [vmem:[#allocation7 + $0x28] sm:$0xf]
    %v442 = vld [vmem:[#allocation7 + $0x2c] sm:$0xf]
    %v443 = vld [vmem:[#allocation7 + $0x30] sm:$0xf]
    %v444 = vld [vmem:[#allocation7 + $0x34] sm:$0xf]
    %v445 = vld [vmem:[#allocation7 + $0x38] sm:$0xf]
    %v446 = vld [vmem:[#allocation7 + $0x3c] sm:$0xf]
    %v447 = vld [vmem:[#allocation7 + $0x40] sm:$0xf]
    %v448 = vld [vmem:[#allocation7 + $0x44] sm:$0xf]
    %v449 = vld [vmem:[#allocation7 + $0x48] sm:$0xf]
    %v450 = vld [vmem:[#allocation7 + $0x4c] sm:$0xf]
    %v451 = vld [vmem:[#allocation7 + $0x50] sm:$0xf]
    %v452 = vld [vmem:[#allocation7 + $0x54] sm:$0xf]
    %v453 = vld [vmem:[#allocation7 + $0x58] sm:$0xf]
    %v454 = vld [vmem:[#allocation7 + $0x5c] sm:$0xf]
    %v455 = vld [vmem:[#allocation7 + $0x60] sm:$0xf]
    %v456 = vld [vmem:[#allocation7 + $0x64] sm:$0xf]
    %v457 = vld [vmem:[#allocation7 + $0x68] sm:$0xf]
    %v458 = vld [vmem:[#allocation7 + $0x6c] sm:$0xf]
    %v459 = vld [vmem:[#allocation7 + $0x70] sm:$0xf]
    %v460 = vld [vmem:[#allocation7 + $0x74] sm:$0xf]
    %v461 = vld [vmem:[#allocation7 + $0x78] sm:$0xf]
    %v462 = vld [vmem:[#allocation7 + $0x7c] sm:$0xf]
    %v463 = vld [vmem:[%s6] sm:$0x1]
    %v465 = vlaneseq
    %v466 = vshrl.u32 %v465, 7
    %v467 = vsub.s32 0, %v466
    %v468 = vrot.slane %v463, %v467
    %v502 = vunpack.c.l.b16 %v431
    %v503 = vunpack.c.l.b16 %v432
    %v504 = vunpack.c.l.b16 %v433
    %v505 = vunpack.c.l.b16 %v434
    %v506 = vunpack.c.l.b16 %v435
    %v507 = vunpack.c.l.b16 %v436
    %v508 = vunpack.c.l.b16 %v437
    %v509 = vunpack.c.l.b16 %v438
    %v510 = vunpack.c.l.b16 %v439
    %v511 = vunpack.c.l.b16 %v440
    %v512 = vunpack.c.l.b16 %v441
    %v513 = vunpack.c.l.b16 %v442
    %v514 = vunpack.c.l.b16 %v443
    %v515 = vunpack.c.l.b16 %v444
    %v516 = vunpack.c.l.b16 %v445
    %v517 = vunpack.c.l.b16 %v446
    %v518 = vunpack.c.l.b16 %v447
    %v519 = vunpack.c.l.b16 %v448
    %v520 = vunpack.c.l.b16 %v449
    %v521 = vunpack.c.l.b16 %v450
    %v522 = vunpack.c.l.b16 %v451
    %v523 = vunpack.c.l.b16 %v452
    %v524 = vunpack.c.l.b16 %v453
    %v525 = vunpack.c.l.b16 %v454
    %v526 = vunpack.c.l.b16 %v455
    %v527 = vunpack.c.l.b16 %v456
    %v528 = vunpack.c.l.b16 %v457
    %v529 = vunpack.c.l.b16 %v458
    %v530 = vunpack.c.l.b16 %v459
    %v531 = vunpack.c.l.b16 %v460
    %v532 = vunpack.c.l.b16 %v461
    %v533 = vunpack.c.l.b16 %v462
    %v534 = vpack.c.b16 %v503, %v502
    %v535 = vpack.c.b16 %v505, %v504
    %v536 = vpack.c.b16 %v507, %v506
    %v537 = vpack.c.b16 %v509, %v508
    %v538 = vpack.c.b16 %v511, %v510
    %v539 = vpack.c.b16 %v513, %v512
    %v540 = vpack.c.b16 %v515, %v514
    %v541 = vpack.c.b16 %v517, %v516
    %v542 = vpack.c.b16 %v519, %v518
    %v543 = vpack.c.b16 %v521, %v520
    %v544 = vpack.c.b16 %v523, %v522
    %v545 = vpack.c.b16 %v525, %v524
    %v546 = vpack.c.b16 %v527, %v526
    %v547 = vpack.c.b16 %v529, %v528
    %v548 = vpack.c.b16 %v531, %v530
    %v549 = vpack.c.b16 %v533, %v532
    %566 = vmatprep.subr.bf16.mxu0 0
    %567 = vmatpush1.bf16.msra.mxu0 %v534
    %568 = vmatprep.subr.bf16.mxu0 0
    %569 = vmatpush1.bf16.msra.mxu0 %v535
    %570 = vmatprep.subr.bf16.mxu0 0
    %571 = vmatpush1.bf16.msra.mxu0 %v536
    %572 = vmatprep.subr.bf16.mxu0 0
    %573 = vmatpush1.bf16.msra.mxu0 %v537
    %574 = vmatprep.subr.bf16.mxu0 0
    %575 = vmatpush1.bf16.msra.mxu0 %v538
    %576 = vmatprep.subr.bf16.mxu0 0
    %577 = vmatpush1.bf16.msra.mxu0 %v539
    %578 = vmatprep.subr.bf16.mxu0 0
    %579 = vmatpush1.bf16.msra.mxu0 %v540
    %580 = vmatprep.subr.bf16.mxu0 0
    %581 = vmatpush1.bf16.msra.mxu0 %v541
    %582 = vmatprep.subr.bf16.mxu0 0
    %583 = vmatpush1.bf16.msra.mxu0 %v542
    %584 = vmatprep.subr.bf16.mxu0 0
    %585 = vmatpush1.bf16.msra.mxu0 %v543
    %586 = vmatprep.subr.bf16.mxu0 0
    %587 = vmatpush1.bf16.msra.mxu0 %v544
    %588 = vmatprep.subr.bf16.mxu0 0
    %589 = vmatpush1.bf16.msra.mxu0 %v545
    %590 = vmatprep.subr.bf16.mxu0 0
    %591 = vmatpush1.bf16.msra.mxu0 %v546
    %592 = vmatprep.subr.bf16.mxu0 0
    %593 = vmatpush1.bf16.msra.mxu0 %v547
    %594 = vmatprep.subr.bf16.mxu0 0
    %595 = vmatpush1.bf16.msra.mxu0 %v548
    %596 = vmatprep.subr.bf16.mxu0 0
    %597 = vmatpush1.bf16.msra.mxu0 %v549
    %598 = vmatprep.mubr.bf16.mxu0 %v430
    %599 = vmatmul.mubr.bf16.gmra.mrb[0].mxu0 %v429
    %v600 = vpop.f32.mrb[0].mxu0
    %v601 = vadd.f32 %v468, %v600
    %v602 = vpop.f32.mrb[0].mxu0
    %v603 = vpop.f32.mrb[0].mxu0
    %v604 = vadd.f32 %v468, %v603
    %v605 = vpop.f32.mrb[0].mxu0
    %606 = vdwg.mxu0
    %607 = vmax.xlane.f32.xlu0 %v601
    %v608 = vpop.xlane.xlu0 %607
    %609 = vmax.xlane.f32.xlu0 %v604
    %v610 = vpop.xlane.xlu0 %609
    %v611 = vsub.f32 %v601, %v608
    %v612 = vsub.f32 %v604, %v610
    %v613 = vmul.f32 %v611, 1.442695
    %v614 = vpow.pop %v613
    %v615 = vmul.f32 %v612, 1.442695
    %v616 = vpow.pop %v615
    %617 = vadd.xlane.f32.xlu0 %v614
    %v618 = vpop.xlane.xlu0 %617
    %619 = vadd.xlane.f32.xlu0 %v616
    %v620 = vpop.xlane.xlu0 %619
    %v621 = vrcp.pop %v618
    %v622 = vrcp.pop %v620
    %v623 = vmul.f32 %v614, %v621
    %v624 = vmul.f32 %v616, %v622
    %vm625 = vcmask 64512
    %626 = vst.msk [vmem:[%s7] sm:$0xff] %vm625, %v623
    %627 = vst.msk [vmem:[%s7 + $0x8] sm:$0xff] %vm625, %v624
    // Predicated region
    $region46: #{tpu_custom_call.1} parent=1 // pred_check
      _
    $region47: #{tpu_custom_call.1} parent=1 // pred_check_branch
      %629 = sbr.rel (0) target = $region49
    $region48: #{tpu_custom_call.1} parent=1 // pred_region
      _
    $region49: #{tpu_custom_call.1} parent=1 // pred_fallthru
      _
    // Predicated region
    $region50: #{tpu_custom_call.1} parent=1 // pred_check
      _
    $region51: #{tpu_custom_call.1} parent=1 // pred_check_branch
      %631 = sbr.rel (0) target = $region53
    $region52: #{tpu_custom_call.1} parent=1 // pred_region
      _
    $region53: #{tpu_custom_call.1} parent=1 // pred_fallthru
      _
    %632 = vsyncpa [#allocation3], 1
    %633 = vsyncpa [#allocation5], 1
    %634 = vsyncpa [#allocation8], 1

</llo_original>
